<compile_context>
chip_gen: v7x
topology: tpu7x:2x2x1
jax: 0.10.0
libtpu: 0.0.40
codegen_flags: <defaults>
</compile_context>

<pallas_src>
import functools

import jax
import jax.numpy as jnp
from jax.experimental import pallas as pl
from jax.experimental.pallas import tpu as pltpu


def _round_up(v, m):
    return ((v + m - 1) // m) * m


def prepare_rnn_params(w_ih, w_hh, b_ih, b_hh, w_o, b_o, mxu_dtype=jnp.float32):
    """One-time (model-init) weight preprocessing: transpose, pad, combine biases.

    Keeping this out of the per-call path avoids ~6 extra XLA ops + HBM round
    trips per forward call on a microsecond-scale kernel.
    """
    H, I = w_ih.shape
    O = w_o.shape[0]
    Ip, Hp, Op = _round_up(I, 128), _round_up(H, 128), _round_up(O, 128)
    f32 = jnp.float32

    wih_t = jnp.zeros((Ip, Hp), f32).at[:I, :H].set(jnp.transpose(w_ih).astype(f32))
    whh_t = jnp.zeros((Hp, Hp), f32).at[:H, :H].set(jnp.transpose(w_hh).astype(f32))
    wo_t = jnp.zeros((Hp, Op), f32).at[:H, :O].set(jnp.transpose(w_o).astype(f32))
    # Combined RNN bias (b_ih + b_hh); stays f32 regardless of MXU dtype.
    b_rnn = jnp.zeros((1, Hp), f32).at[0, :H].set((b_ih + b_hh).astype(f32))
    # Padded output columns get a huge negative bias so they vanish in log_softmax.
    # Kept in f32 even when the matmul operands are bf16.
    bo = jnp.full((1, Op), -1e30, f32).at[0, :O].set(b_o.astype(f32))

    return dict(
        wih_t=wih_t.astype(mxu_dtype),
        whh_t=whh_t.astype(mxu_dtype),
        wo_t=wo_t.astype(mxu_dtype),
        b_rnn=b_rnn,
        bo=bo,
    )


def _rnn_kernel(S, Bp, mxu_dtype,
                x_ref, wih_ref, whh_ref, brnn_ref, wo_ref, bo_ref, out_ref):
    f32 = jnp.float32

    # ---- Hoisted input projection (off the serial critical path) -----------
    # One (S*Bp, Ip) @ (Ip, Hp) matmul for all timesteps, combined bias folded
    # in.  Result stays in vregs (no VMEM scratch round-trip).
    pre = jnp.dot(x_ref[...], wih_ref[...], preferred_element_type=f32)
    pre = pre + brnn_ref[...]                       # (S*Bp, Hp), f32

    # ---- Serial recurrence ---------------------------------------------------
    # W_hh loaded once and reused by every unrolled step; `pre` indexed with
    # static, sublane-aligned slices.  h_0 == 0, so step 0 has no h @ W_hh.
    whh = whh_ref[...]
    h = jnp.tanh(pre[0:Bp, :])
    for t in range(1, S):
        hh = jnp.dot(h.astype(mxu_dtype), whh, preferred_element_type=f32)
        h = jnp.tanh(pre[t * Bp:(t + 1) * Bp, :] + hh)
    # TODO(synk): consider pltpu.matmul_push_rhs/acc_lhs/pop to keep W_hh staged
    # in the MXU across timesteps (per-step RHS fill dominates at Bp=8); the
    # result-path semantics differ between MRF (v5e/v6e) and MRB (v7x).

    # ---- Output head (W_o loaded only after the recurrence) + log_softmax -----
    logits = jnp.dot(h.astype(mxu_dtype), wo_ref[...], preferred_element_type=f32)
    logits = logits + bo_ref[...]
    m = jnp.max(logits, axis=1, keepdims=True)
    shifted = logits - m
    lse = jnp.log(jnp.sum(jnp.exp(shifted), axis=1, keepdims=True))
    out_ref[...] = shifted - lse
    # TODO(synk): training-mode Dropout(0.1) omitted (identity at inference).


@functools.partial(jax.jit, static_argnames=("output_size",))
def rnn_forward(x_bsi, params, output_size):
    """x_bsi: (batch, seq, input_size) float32 (PyTorch batch_first layout)."""
    B, S, I = x_bsi.shape
    wih_t, whh_t, wo_t = params["wih_t"], params["whh_t"], params["wo_t"]
    b_rnn, bo = params["b_rnn"], params["bo"]
    Ip, Hp = wih_t.shape
    Op = wo_t.shape[1]
    mxu_dtype = whh_t.dtype
    f32 = jnp.float32

    Bp = _round_up(max(B, 8), 8)                    # sublane-dense batch

    # Time-major, zero-padded, flattened to a lane/sublane-dense (S*Bp, Ip) slab
    # so the kernel needs no reshapes; fuses under jit.
    x_sbi = jnp.transpose(x_bsi.astype(mxu_dtype), (1, 0, 2))
    x_pad = jnp.zeros((S, Bp, Ip), mxu_dtype).at[:, :B, :I].set(x_sbi)
    x_pad = x_pad.reshape(S * Bp, Ip)

    kernel = functools.partial(_rnn_kernel, S, Bp, mxu_dtype)
    vmem = pl.BlockSpec(memory_space=pltpu.MemorySpace.VMEM)

    out_pad = pl.pallas_call(
        kernel,
        out_shape=jax.ShapeDtypeStruct((Bp, Op), f32),
        in_specs=[vmem] * 6,
        out_specs=vmem,
    )(x_pad, wih_t, whh_t, b_rnn, wo_t, bo)

    return out_pad[:B, :output_size]


def rnn_reference(x_bsi, w_ih, w_hh, b_ih, b_hh, w_o, b_o):
    """Pure-JAX reference matching torch nn.RNN + Linear + log_softmax."""
    B, S, I = x_bsi.shape
    H = w_hh.shape[0]
    h = jnp.zeros((B, H), jnp.float32)
    for t in range(S):
        h = jnp.tanh(x_bsi[:, t, :] @ w_ih.T + b_ih + h @ w_hh.T + b_hh)
    logits = h @ w_o.T + b_o
    return jax.nn.log_softmax(logits, axis=1)


if __name__ == "__main__":
    # Shapes consistent with name_generator.py:
    #   ALL_CHARS = START + 52 ascii letters + " .,;'-" + END -> 60 chars,
    #   input = one-hot(char) ++ one-hot(category) ~ 78, hidden fixed at 128.
    batch_size = 4
    seq_len = 8
    input_size = 78
    hidden_size = 128
    output_size = 60

    key = jax.random.PRNGKey(0)
    kx, k1, k2, k3, k4, k5, k6 = jax.random.split(key, 7)
    scale = 1.0 / jnp.sqrt(hidden_size)

    x = jax.random.normal(kx, (batch_size, seq_len, input_size), jnp.float32)
    w_ih = jax.random.uniform(k1, (hidden_size, input_size), jnp.float32, -scale, scale)
    w_hh = jax.random.uniform(k2, (hidden_size, hidden_size), jnp.float32, -scale, scale)
    b_ih = jax.random.uniform(k3, (hidden_size,), jnp.float32, -scale, scale)
    b_hh = jax.random.uniform(k4, (hidden_size,), jnp.float32, -scale, scale)
    w_o = jax.random.uniform(k5, (output_size, hidden_size), jnp.float32, -scale, scale)
    b_o = jax.random.uniform(k6, (output_size,), jnp.float32, -scale, scale)

    ref = rnn_reference(x, w_ih, w_hh, b_ih, b_hh, w_o, b_o)

    # f32 MXU operands (default; exact path, preferred on v5e).
    params_f32 = prepare_rnn_params(w_ih, w_hh, b_ih, b_hh, w_o, b_o,
                                    mxu_dtype=jnp.float32)
    out_f32 = jax.block_until_ready(rnn_forward(x, params_f32, output_size=output_size))
    assert out_f32.shape == (batch_size, output_size)
    assert jnp.allclose(out_f32, ref, atol=1e-5, rtol=1e-5), "f32 kernel mismatch"

    # bf16 MXU operands with f32 accumulation (v6e/v7x fast path); looser gate.
    params_bf16 = prepare_rnn_params(w_ih, w_hh, b_ih, b_hh, w_o, b_o,
                                     mxu_dtype=jnp.bfloat16)
    out_bf16 = jax.block_until_ready(rnn_forward(x, params_bf16, output_size=output_size))
    assert out_bf16.shape == (batch_size, output_size)
    assert jnp.allclose(out_bf16, ref, atol=5e-2, rtol=5e-2), "bf16 kernel mismatch"

    print("KERNEL_OK")
</pallas_src>

<mosaic_0001>
module attributes {stable_mosaic.version = 11 : i64} {
  func.func @_rnn_kernel(%arg0: memref<64x128xf32, #tpu.memory_space<vmem>>, %arg1: memref<128x128xf32, #tpu.memory_space<vmem>>, %arg2: memref<128x128xf32, #tpu.memory_space<vmem>>, %arg3: memref<1x128xf32, #tpu.memory_space<vmem>>, %arg4: memref<128x128xf32, #tpu.memory_space<vmem>>, %arg5: memref<1x128xf32, #tpu.memory_space<vmem>>, %arg6: memref<8x128xf32, #tpu.memory_space<vmem>>) attributes {dimension_semantics = [], scalar_prefetch = 0 : i64, scratch_operands = 0 : i64, tpu.core_type = #tpu.core_type<tc>} {
    %c0 = arith.constant 0 : index
    %c0_0 = arith.constant 0 : index
    %0 = vector.load %arg0[%c0, %c0_0] : memref<64x128xf32, #tpu.memory_space<vmem>>, vector<64x128xf32>
    %c0_1 = arith.constant 0 : index
    %c0_2 = arith.constant 0 : index
    %1 = vector.load %arg1[%c0_1, %c0_2] : memref<128x128xf32, #tpu.memory_space<vmem>>, vector<128x128xf32>
    %cst = arith.constant dense<0.000000e+00> : vector<64x128xf32>
    %2 = tpu.matmul %0, %1, %cst {dimension_numbers = #tpu.dot_dimension_numbers<[1], [0], [0], [1], [0, 0, 1, 1], [], []>} : vector<64x128xf32>, vector<128x128xf32>, vector<64x128xf32> -> vector<64x128xf32>
    %c0_3 = arith.constant 0 : index
    %c0_4 = arith.constant 0 : index
    %3 = vector.load %arg3[%c0_3, %c0_4] : memref<1x128xf32, #tpu.memory_space<vmem>>, vector<1x128xf32>
    %4 = vector.broadcast %3 : vector<1x128xf32> to vector<64x128xf32>
    %5 = arith.addf %2, %4 : vector<64x128xf32>
    %c0_5 = arith.constant 0 : index
    %c0_6 = arith.constant 0 : index
    %6 = vector.load %arg2[%c0_5, %c0_6] : memref<128x128xf32, #tpu.memory_space<vmem>>, vector<128x128xf32>
    %7 = vector.extract_strided_slice %5 {offsets = [0, 0], sizes = [8, 128], strides = [1, 1]} : vector<64x128xf32> to vector<8x128xf32>
    %8 = math.tanh %7 : vector<8x128xf32>
    %cst_7 = arith.constant dense<0.000000e+00> : vector<8x128xf32>
    %9 = tpu.matmul %8, %6, %cst_7 {dimension_numbers = #tpu.dot_dimension_numbers<[1], [0], [0], [1], [0, 0, 1, 1], [], []>} : vector<8x128xf32>, vector<128x128xf32>, vector<8x128xf32> -> vector<8x128xf32>
    %10 = vector.extract_strided_slice %5 {offsets = [8, 0], sizes = [8, 128], strides = [1, 1]} : vector<64x128xf32> to vector<8x128xf32>
    %11 = arith.addf %10, %9 : vector<8x128xf32>
    %12 = math.tanh %11 : vector<8x128xf32>
    %cst_8 = arith.constant dense<0.000000e+00> : vector<8x128xf32>
    %13 = tpu.matmul %12, %6, %cst_8 {dimension_numbers = #tpu.dot_dimension_numbers<[1], [0], [0], [1], [0, 0, 1, 1], [], []>} : vector<8x128xf32>, vector<128x128xf32>, vector<8x128xf32> -> vector<8x128xf32>
    %14 = vector.extract_strided_slice %5 {offsets = [16, 0], sizes = [8, 128], strides = [1, 1]} : vector<64x128xf32> to vector<8x128xf32>
    %15 = arith.addf %14, %13 : vector<8x128xf32>
    %16 = math.tanh %15 : vector<8x128xf32>
    %cst_9 = arith.constant dense<0.000000e+00> : vector<8x128xf32>
    %17 = tpu.matmul %16, %6, %cst_9 {dimension_numbers = #tpu.dot_dimension_numbers<[1], [0], [0], [1], [0, 0, 1, 1], [], []>} : vector<8x128xf32>, vector<128x128xf32>, vector<8x128xf32> -> vector<8x128xf32>
    %18 = vector.extract_strided_slice %5 {offsets = [24, 0], sizes = [8, 128], strides = [1, 1]} : vector<64x128xf32> to vector<8x128xf32>
    %19 = arith.addf %18, %17 : vector<8x128xf32>
    %20 = math.tanh %19 : vector<8x128xf32>
    %cst_10 = arith.constant dense<0.000000e+00> : vector<8x128xf32>
    %21 = tpu.matmul %20, %6, %cst_10 {dimension_numbers = #tpu.dot_dimension_numbers<[1], [0], [0], [1], [0, 0, 1, 1], [], []>} : vector<8x128xf32>, vector<128x128xf32>, vector<8x128xf32> -> vector<8x128xf32>
    %22 = vector.extract_strided_slice %5 {offsets = [32, 0], sizes = [8, 128], strides = [1, 1]} : vector<64x128xf32> to vector<8x128xf32>
    %23 = arith.addf %22, %21 : vector<8x128xf32>
    %24 = math.tanh %23 : vector<8x128xf32>
    %cst_11 = arith.constant dense<0.000000e+00> : vector<8x128xf32>
    %25 = tpu.matmul %24, %6, %cst_11 {dimension_numbers = #tpu.dot_dimension_numbers<[1], [0], [0], [1], [0, 0, 1, 1], [], []>} : vector<8x128xf32>, vector<128x128xf32>, vector<8x128xf32> -> vector<8x128xf32>
    %26 = vector.extract_strided_slice %5 {offsets = [40, 0], sizes = [8, 128], strides = [1, 1]} : vector<64x128xf32> to vector<8x128xf32>
    %27 = arith.addf %26, %25 : vector<8x128xf32>
    %28 = math.tanh %27 : vector<8x128xf32>
    %cst_12 = arith.constant dense<0.000000e+00> : vector<8x128xf32>
    %29 = tpu.matmul %28, %6, %cst_12 {dimension_numbers = #tpu.dot_dimension_numbers<[1], [0], [0], [1], [0, 0, 1, 1], [], []>} : vector<8x128xf32>, vector<128x128xf32>, vector<8x128xf32> -> vector<8x128xf32>
    %30 = vector.extract_strided_slice %5 {offsets = [48, 0], sizes = [8, 128], strides = [1, 1]} : vector<64x128xf32> to vector<8x128xf32>
    %31 = arith.addf %30, %29 : vector<8x128xf32>
    %32 = math.tanh %31 : vector<8x128xf32>
    %cst_13 = arith.constant dense<0.000000e+00> : vector<8x128xf32>
    %33 = tpu.matmul %32, %6, %cst_13 {dimension_numbers = #tpu.dot_dimension_numbers<[1], [0], [0], [1], [0, 0, 1, 1], [], []>} : vector<8x128xf32>, vector<128x128xf32>, vector<8x128xf32> -> vector<8x128xf32>
    %34 = vector.extract_strided_slice %5 {offsets = [56, 0], sizes = [8, 128], strides = [1, 1]} : vector<64x128xf32> to vector<8x128xf32>
    %35 = arith.addf %34, %33 : vector<8x128xf32>
    %36 = math.tanh %35 : vector<8x128xf32>
    %c0_14 = arith.constant 0 : index
    %c0_15 = arith.constant 0 : index
    %37 = vector.load %arg4[%c0_14, %c0_15] : memref<128x128xf32, #tpu.memory_space<vmem>>, vector<128x128xf32>
    %cst_16 = arith.constant dense<0.000000e+00> : vector<8x128xf32>
    %38 = tpu.matmul %36, %37, %cst_16 {dimension_numbers = #tpu.dot_dimension_numbers<[1], [0], [0], [1], [0, 0, 1, 1], [], []>} : vector<8x128xf32>, vector<128x128xf32>, vector<8x128xf32> -> vector<8x128xf32>
    %c0_17 = arith.constant 0 : index
    %c0_18 = arith.constant 0 : index
    %39 = vector.load %arg5[%c0_17, %c0_18] : memref<1x128xf32, #tpu.memory_space<vmem>>, vector<1x128xf32>
    %40 = vector.broadcast %39 : vector<1x128xf32> to vector<8x128xf32>
    %41 = arith.addf %38, %40 : vector<8x128xf32>
    %cst_19 = arith.constant dense<0xFF800000> : vector<8xf32>
    %42 = vector.multi_reduction <maximumf>, %41, %cst_19 [1] : vector<8x128xf32> to vector<8xf32>
    %43 = vector.shape_cast %42 : vector<8xf32> to vector<8x1xf32>
    %44 = vector.broadcast %43 : vector<8x1xf32> to vector<8x128xf32>
    %45 = arith.subf %41, %44 : vector<8x128xf32>
    %46 = math.exp %45 : vector<8x128xf32>
    %cst_20 = arith.constant dense<0.000000e+00> : vector<8xf32>
    %47 = vector.multi_reduction <add>, %46, %cst_20 [1] : vector<8x128xf32> to vector<8xf32>
    %48 = vector.shape_cast %47 : vector<8xf32> to vector<8x1xf32>
    %49 = math.log %48 : vector<8x1xf32>
    %50 = vector.broadcast %49 : vector<8x1xf32> to vector<8x128xf32>
    %51 = arith.subf %45, %50 : vector<8x128xf32>
    %c0_21 = arith.constant 0 : index
    %c0_22 = arith.constant 0 : index
    %52 = vector.load %arg6[%c0_21, %c0_22] : memref<8x128xf32, #tpu.memory_space<vmem>>, vector<8x128xf32>
    tpu.vector_store %arg6[%c0_21, %c0_22], %51 {strides = array<i32>} : memref<8x128xf32, #tpu.memory_space<vmem>>, vector<8x128xf32>,
    return
  }
}

</mosaic_0001>

<llo_original>
// kernel: rnn_forward.1
$region0: #{rnn_forward.1}
  #allocation0 [shape = 'u32[]', space=smem, size = 0x4, offset = 0x4, fixed_abs, tag = 'smem constant byte address 0x4 - core index']
  #allocation1 [shape = 'u32[144,128]{1,0:T(1,128)}', space=vmem, size = 0x12000, scoped, tag = 'internal scratch']
  %s0 = inlined_call_operand.vmem [shape: f32[64,128], index: 0, kind: input, shape index: {}]
  %s1 = inlined_call_operand.vmem [shape: f32[128,128], index: 1, kind: input, shape index: {}]
  %s2 = inlined_call_operand.hbm [shape: f32[128,128], index: 2, kind: input, shape index: {}]
  %s3 = inlined_call_operand.vmem [shape: f32[1,128], index: 3, kind: input, shape index: {}]
  %s4 = inlined_call_operand.hbm [shape: f32[128,128], index: 4, kind: input, shape index: {}]
  %s5 = inlined_call_operand.vmem [shape: f32[1,128], index: 5, kind: input, shape index: {}]
  %s6 = inlined_call_operand.vmem [shape: f32[8,128], index: 6, kind: output, shape index: {}]
  %s7 = sld [smem:[#allocation0]]
  $region42: #{rnn_forward.1} parent=0
    _
  %s9 = ssub.s32 1, %s7
  %s10 = scalar_select 0, %s9, %s7
  $region1: #{rnn_forward.1} parent=0
    #allocation2 [shape = 'u8[65536]{0}', space=vmem, size = 0x10000, scoped, tag = 'input window, operand 2, single buffered']
    #allocation3 [shape = 's32[1]{0}', space=sflag, size = 0x4, scoped, tag = 'scoped memory for rnn_forward.1']
    #allocation4 [shape = 'u8[65536]{0}', space=vmem, size = 0x10000, scoped, tag = 'input window, operand 4, single buffered']
    #allocation5 [shape = 's32[1]{0}', space=sflag, size = 0x4, scoped, tag = 'scoped memory for rnn_forward.1']
    %11 = vsyncpa [#allocation3], 0
    %12 = vsyncpa [#allocation5], 0
    // Predicated region
    $region2: #{rnn_forward.1} parent=1 // pred_check
      _
    $region3: #{rnn_forward.1} parent=1 // pred_check_branch
      %14 = sbr.rel (0) target = $region5
    $region4: #{rnn_forward.1} parent=1 // pred_region
      _
    $region5: #{rnn_forward.1} parent=1 // pred_fallthru
      _
    // Predicated region
    $region6: #{rnn_forward.1} parent=1 // pred_check
      _
    $region7: #{rnn_forward.1} parent=1 // pred_check_branch
      %16 = sbr.rel (0) target = $region9
    $region8: #{rnn_forward.1} parent=1 // pred_region
      _
    $region9: #{rnn_forward.1} parent=1 // pred_fallthru
      _
    // Predicated region
    $region10: #{rnn_forward.1} parent=1 // pred_check
      _
    $region11: #{rnn_forward.1} parent=1 // pred_check_branch
      %18 = sbr.rel (0) target = $region13
    $region12: #{rnn_forward.1} parent=1 // pred_region
      %s20 = ssub.s32 2048, 2048
      %21 = vsyncadd [#allocation3], %s20
      %s22 = sshll.u32 [#allocation2], 4
      %s23 = int_to_ptr.vmem [resolvable:$true] %s22
      %28 = dma.hbm_to_vmem [thread:$0]  %s2, 2048, %s23, [#allocation3], 128, 128, 8
    $region13: #{rnn_forward.1} parent=1 // pred_fallthru
      _
    // Predicated region
    $region14: #{rnn_forward.1} parent=1 // pred_check
      _
    $region15: #{rnn_forward.1} parent=1 // pred_check_branch
      %30 = sbr.rel (0) target = $region17
    $region16: #{rnn_forward.1} parent=1 // pred_region
      _
    $region17: #{rnn_forward.1} parent=1 // pred_fallthru
      _
    // Predicated region
    $region18: #{rnn_forward.1} parent=1 // pred_check
      _
    $region19: #{rnn_forward.1} parent=1 // pred_check_branch
      %32 = sbr.rel (0) target = $region21
    $region20: #{rnn_forward.1} parent=1 // pred_region
      %s34 = ssub.s32 2048, 2048
      %35 = vsyncadd [#allocation5], %s34
      %s36 = sshll.u32 [#allocation4], 4
      %s37 = int_to_ptr.vmem [resolvable:$true] %s36
      %42 = dma.hbm_to_vmem [thread:$0]  %s4, 2048, %s37, [#allocation5], 128, 128, 8
    $region21: #{rnn_forward.1} parent=1 // pred_fallthru
      _
    // Predicated region
    $region22: #{rnn_forward.1} parent=1 // pred_check
      _
    $region23: #{rnn_forward.1} parent=1 // pred_check_branch
      %44 = sbr.rel (0) target = $region25
    $region24: #{rnn_forward.1} parent=1 // pred_region
      _
    $region25: #{rnn_forward.1} parent=1 // pred_fallthru
      _
    // Predicated region
    $region26: #{rnn_forward.1} parent=1 // pred_check
      _
    $region27: #{rnn_forward.1} parent=1 // pred_check_branch
      %46 = sbr.rel (0) target = $region29
    $region28: #{rnn_forward.1} parent=1 // pred_region
      %47 = dma.done [#allocation3], 2048
    $region29: #{rnn_forward.1} parent=1 // pred_fallthru
      _
    // Predicated region
    $region30: #{rnn_forward.1} parent=1 // pred_check
      _
    $region31: #{rnn_forward.1} parent=1 // pred_check_branch
      %49 = sbr.rel (0) target = $region33
    $region32: #{rnn_forward.1} parent=1 // pred_region
      %50 = dma.done [#allocation5], 2048
    $region33: #{rnn_forward.1} parent=1 // pred_fallthru
      _
    %v51 = vld [vmem:[%s0] sm:$0xff]
    %v52 = vld [vmem:[%s0 + $0x8] sm:$0xff]
    %v53 = vld [vmem:[%s0 + $0x10] sm:$0xff]
    %v54 = vld [vmem:[%s0 + $0x18] sm:$0xff]
    %v55 = vld [vmem:[%s0 + $0x20] sm:$0xff]
    %v56 = vld [vmem:[%s0 + $0x28] sm:$0xff]
    %v57 = vld [vmem:[%s0 + $0x30] sm:$0xff]
    %v58 = vld [vmem:[%s0 + $0x38] sm:$0xff]
    %v59 = vld [vmem:[%s1] sm:$0xff]
    %v60 = vld [vmem:[%s1 + $0x8] sm:$0xff]
    %v61 = vld [vmem:[%s1 + $0x10] sm:$0xff]
    %v62 = vld [vmem:[%s1 + $0x18] sm:$0xff]
    %v63 = vld [vmem:[%s1 + $0x20] sm:$0xff]
    %v64 = vld [vmem:[%s1 + $0x28] sm:$0xff]
    %v65 = vld [vmem:[%s1 + $0x30] sm:$0xff]
    %v66 = vld [vmem:[%s1 + $0x38] sm:$0xff]
    %v67 = vld [vmem:[%s1 + $0x40] sm:$0xff]
    %v68 = vld [vmem:[%s1 + $0x48] sm:$0xff]
    %v69 = vld [vmem:[%s1 + $0x50] sm:$0xff]
    %v70 = vld [vmem:[%s1 + $0x58] sm:$0xff]
    %v71 = vld [vmem:[%s1 + $0x60] sm:$0xff]
    %v72 = vld [vmem:[%s1 + $0x68] sm:$0xff]
    %v73 = vld [vmem:[%s1 + $0x70] sm:$0xff]
    %v74 = vld [vmem:[%s1 + $0x78] sm:$0xff]
    %v75 = vld [vmem:[%s3] sm:$0x1]
    %v77 = vlaneseq
    %v78 = vshrl.u32 %v77, 7
    %v79 = vsub.s32 0, %v78
    %v80 = vrot.slane %v75, %v79
    %82 = vmatprep.subr.mxu0 0.0
    %83 = vmatpush1.msra.mxu0 %v59
    %84 = vmatprep.subr.mxu0 0.0
    %85 = vmatpush1.msra.mxu0 %v60
    %86 = vmatprep.subr.mxu0 0.0
    %87 = vmatpush1.msra.mxu0 %v61
    %88 = vmatprep.subr.mxu0 0.0
    %89 = vmatpush1.msra.mxu0 %v62
    %90 = vmatprep.subr.mxu0 0.0
    %91 = vmatpush1.msra.mxu0 %v63
    %92 = vmatprep.subr.mxu0 0.0
    %93 = vmatpush1.msra.mxu0 %v64
    %94 = vmatprep.subr.mxu0 0.0
    %95 = vmatpush1.msra.mxu0 %v65
    %96 = vmatprep.subr.mxu0 0.0
    %97 = vmatpush1.msra.mxu0 %v66
    %98 = vmatprep.subr.mxu0 0.0
    %99 = vmatpush1.msra.mxu0 %v67
    %100 = vmatprep.subr.mxu0 0.0
    %101 = vmatpush1.msra.mxu0 %v68
    %102 = vmatprep.subr.mxu0 0.0
    %103 = vmatpush1.msra.mxu0 %v69
    %104 = vmatprep.subr.mxu0 0.0
    %105 = vmatpush1.msra.mxu0 %v70
    %106 = vmatprep.subr.mxu0 0.0
    %107 = vmatpush1.msra.mxu0 %v71
    %108 = vmatprep.subr.mxu0 0.0
    %109 = vmatpush1.msra.mxu0 %v72
    %110 = vmatprep.subr.mxu0 0.0
    %111 = vmatpush1.msra.mxu0 %v73
    %112 = vmatprep.subr.mxu0 0.0
    %113 = vmatpush1.msra.mxu0 %v74
    %114 = vmatprep.subr.mxu0 0.0
    %115 = vmatpush1.msra.mxu0 0.0
    %116 = vmatprep.subr.mxu0 0.0
    %117 = vmatpush1.msra.mxu0 0.0
    %118 = vmatprep.subr.mxu0 0.0
    %119 = vmatpush1.msra.mxu0 0.0
    %120 = vmatprep.subr.mxu0 0.0
    %121 = vmatpush1.msra.mxu0 0.0
    %122 = vmatprep.subr.mxu0 0.0
    %123 = vmatpush1.msra.mxu0 0.0
    %124 = vmatprep.subr.mxu0 0.0
    %125 = vmatpush1.msra.mxu0 0.0
    %126 = vmatprep.subr.mxu0 0.0
    %127 = vmatpush1.msra.mxu0 0.0
    %128 = vmatprep.subr.mxu0 0.0
    %129 = vmatpush1.msra.mxu0 0.0
    %130 = vmatprep.subr.mxu0 0.0
    %131 = vmatpush1.msra.mxu0 0.0
    %132 = vmatprep.subr.mxu0 0.0
    %133 = vmatpush1.msra.mxu0 0.0
    %134 = vmatprep.subr.mxu0 0.0
    %135 = vmatpush1.msra.mxu0 0.0
    %136 = vmatprep.subr.mxu0 0.0
    %137 = vmatpush1.msra.mxu0 0.0
    %138 = vmatprep.subr.mxu0 0.0
    %139 = vmatpush1.msra.mxu0 0.0
    %140 = vmatprep.subr.mxu0 0.0
    %141 = vmatpush1.msra.mxu0 0.0
    %142 = vmatprep.subr.mxu0 0.0
    %143 = vmatpush1.msra.mxu0 0.0
    %144 = vmatprep.subr.mxu0 0.0
    %145 = vmatpush1.msra.mxu0 0.0
    %146 = vmatprep.mubr.f32.mxu0 0.0
    %147 = vmatmul.mubr.f32.gmra.mrb[0].mxu0 %v51
    %v148 = vpop.f32.mrb[0].mxu0
    %v149 = vadd.f32 %v80, %v148
    %v150 = vpop.f32.mrb[0].mxu0
    %151 = vmatprep.mubr.f32.mxu0 0.0
    %152 = vmatmul.mubr.f32.gmra.mrb[0].mxu0 %v52
    %v153 = vpop.f32.mrb[0].mxu0
    %v154 = vadd.f32 %v80, %v153
    %v155 = vpop.f32.mrb[0].mxu0
    %156 = vmatprep.mubr.f32.mxu0 0.0
    %157 = vmatmul.mubr.f32.gmra.mrb[0].mxu0 %v53
    %v158 = vpop.f32.mrb[0].mxu0
    %v159 = vadd.f32 %v80, %v158
    %v160 = vpop.f32.mrb[0].mxu0
    %161 = vmatprep.mubr.f32.mxu0 0.0
    %162 = vmatmul.mubr.f32.gmra.mrb[0].mxu0 %v54
    %v163 = vpop.f32.mrb[0].mxu0
    %v164 = vadd.f32 %v80, %v163
    %v165 = vpop.f32.mrb[0].mxu0
    %166 = vmatprep.mubr.f32.mxu0 0.0
    %167 = vmatmul.mubr.f32.gmra.mrb[0].mxu0 %v55
    %v168 = vpop.f32.mrb[0].mxu0
    %v169 = vadd.f32 %v80, %v168
    %v170 = vpop.f32.mrb[0].mxu0
    %171 = vmatprep.mubr.f32.mxu0 0.0
    %172 = vmatmul.mubr.f32.gmra.mrb[0].mxu0 %v56
    %v173 = vpop.f32.mrb[0].mxu0
    %v174 = vadd.f32 %v80, %v173
    %v175 = vpop.f32.mrb[0].mxu0
    %176 = vmatprep.mubr.f32.mxu0 0.0
    %177 = vmatmul.mubr.f32.gmra.mrb[0].mxu0 %v57
    %v178 = vpop.f32.mrb[0].mxu0
    %v179 = vadd.f32 %v80, %v178
    %v180 = vpop.f32.mrb[0].mxu0
    %181 = vmatprep.mubr.f32.mxu0 0.0
    %182 = vmatmul.mubr.f32.gmra.mrb[0].mxu0 %v58
    %v183 = vpop.f32.mrb[0].mxu0
    %v184 = vadd.f32 %v80, %v183
    %v185 = vpop.f32.mrb[0].mxu0
    %186 = vdwg.mxu0
    %v187 = vld [vmem:[#allocation2] sm:$0xff]
    %v188 = vld [vmem:[#allocation2 + $0x8] sm:$0xff]
    %v189 = vld [vmem:[#allocation2 + $0x10] sm:$0xff]
    %v190 = vld [vmem:[#allocation2 + $0x18] sm:$0xff]
    %v191 = vld [vmem:[#allocation2 + $0x20] sm:$0xff]
    %v192 = vld [vmem:[#allocation2 + $0x28] sm:$0xff]
    %v193 = vld [vmem:[#allocation2 + $0x30] sm:$0xff]
    %v194 = vld [vmem:[#allocation2 + $0x38] sm:$0xff]
    %v195 = vld [vmem:[#allocation2 + $0x40] sm:$0xff]
    %v196 = vld [vmem:[#allocation2 + $0x48] sm:$0xff]
    %v197 = vld [vmem:[#allocation2 + $0x50] sm:$0xff]
    %v198 = vld [vmem:[#allocation2 + $0x58] sm:$0xff]
    %v199 = vld [vmem:[#allocation2 + $0x60] sm:$0xff]
    %v200 = vld [vmem:[#allocation2 + $0x68] sm:$0xff]
    %v201 = vld [vmem:[#allocation2 + $0x70] sm:$0xff]
    %v202 = vld [vmem:[#allocation2 + $0x78] sm:$0xff]
    %v203 = vtanh.pop %v149
    %204 = vmatprep.subr.mxu0 0.0
    %205 = vmatpush1.msra.mxu0 %v187
    %206 = vmatprep.subr.mxu0 0.0
    %207 = vmatpush1.msra.mxu0 %v188
    %208 = vmatprep.subr.mxu0 0.0
    %209 = vmatpush1.msra.mxu0 %v189
    %210 = vmatprep.subr.mxu0 0.0
    %211 = vmatpush1.msra.mxu0 %v190
    %212 = vmatprep.subr.mxu0 0.0
    %213 = vmatpush1.msra.mxu0 %v191
    %214 = vmatprep.subr.mxu0 0.0
    %215 = vmatpush1.msra.mxu0 %v192
    %216 = vmatprep.subr.mxu0 0.0
    %217 = vmatpush1.msra.mxu0 %v193
    %218 = vmatprep.subr.mxu0 0.0
    %219 = vmatpush1.msra.mxu0 %v194
    %220 = vmatprep.subr.mxu0 0.0
    %221 = vmatpush1.msra.mxu0 %v195
    %222 = vmatprep.subr.mxu0 0.0
    %223 = vmatpush1.msra.mxu0 %v196
    %224 = vmatprep.subr.mxu0 0.0
    %225 = vmatpush1.msra.mxu0 %v197
    %226 = vmatprep.subr.mxu0 0.0
    %227 = vmatpush1.msra.mxu0 %v198
    %228 = vmatprep.subr.mxu0 0.0
    %229 = vmatpush1.msra.mxu0 %v199
    %230 = vmatprep.subr.mxu0 0.0
    %231 = vmatpush1.msra.mxu0 %v200
    %232 = vmatprep.subr.mxu0 0.0
    %233 = vmatpush1.msra.mxu0 %v201
    %234 = vmatprep.subr.mxu0 0.0
    %235 = vmatpush1.msra.mxu0 %v202
    %236 = vmatprep.subr.mxu0 0.0
    %237 = vmatpush1.msra.mxu0 0.0
    %238 = vmatprep.subr.mxu0 0.0
    %239 = vmatpush1.msra.mxu0 0.0
    %240 = vmatprep.subr.mxu0 0.0
    %241 = vmatpush1.msra.mxu0 0.0
    %242 = vmatprep.subr.mxu0 0.0
    %243 = vmatpush1.msra.mxu0 0.0
    %244 = vmatprep.subr.mxu0 0.0
    %245 = vmatpush1.msra.mxu0 0.0
    %246 = vmatprep.subr.mxu0 0.0
    %247 = vmatpush1.msra.mxu0 0.0
    %248 = vmatprep.subr.mxu0 0.0
    %249 = vmatpush1.msra.mxu0 0.0
    %250 = vmatprep.subr.mxu0 0.0
    %251 = vmatpush1.msra.mxu0 0.0
    %252 = vmatprep.subr.mxu0 0.0
    %253 = vmatpush1.msra.mxu0 0.0
    %254 = vmatprep.subr.mxu0 0.0
    %255 = vmatpush1.msra.mxu0 0.0
    %256 = vmatprep.subr.mxu0 0.0
    %257 = vmatpush1.msra.mxu0 0.0
    %258 = vmatprep.subr.mxu0 0.0
    %259 = vmatpush1.msra.mxu0 0.0
    %260 = vmatprep.subr.mxu0 0.0
    %261 = vmatpush1.msra.mxu0 0.0
    %262 = vmatprep.subr.mxu0 0.0
    %263 = vmatpush1.msra.mxu0 0.0
    %264 = vmatprep.subr.mxu0 0.0
    %265 = vmatpush1.msra.mxu0 0.0
    %266 = vmatprep.subr.mxu0 0.0
    %267 = vmatpush1.msra.mxu0 0.0
    %268 = vmatprep.mubr.f32.mxu0 0.0
    %269 = vmatmul.mubr.f32.gmra.mrb[0].mxu0 %v203
    %v270 = vpop.f32.mrb[0].mxu0
    %v271 = vadd.f32 0.0, %v270
    %v272 = vpop.f32.mrb[0].mxu0
    %273 = vdwg.mxu0
    %v274 = vadd.f32 %v154, %v271
    %v275 = vtanh.pop %v274
    %276 = vmatprep.subr.mxu0 0.0
    %277 = vmatpush1.msra.mxu0 %v187
    %278 = vmatprep.subr.mxu0 0.0
    %279 = vmatpush1.msra.mxu0 %v188
    %280 = vmatprep.subr.mxu0 0.0
    %281 = vmatpush1.msra.mxu0 %v189
    %282 = vmatprep.subr.mxu0 0.0
    %283 = vmatpush1.msra.mxu0 %v190
    %284 = vmatprep.subr.mxu0 0.0
    %285 = vmatpush1.msra.mxu0 %v191
    %286 = vmatprep.subr.mxu0 0.0
    %287 = vmatpush1.msra.mxu0 %v192
    %288 = vmatprep.subr.mxu0 0.0
    %289 = vmatpush1.msra.mxu0 %v193
    %290 = vmatprep.subr.mxu0 0.0
    %291 = vmatpush1.msra.mxu0 %v194
    %292 = vmatprep.subr.mxu0 0.0
    %293 = vmatpush1.msra.mxu0 %v195
    %294 = vmatprep.subr.mxu0 0.0
    %295 = vmatpush1.msra.mxu0 %v196
    %296 = vmatprep.subr.mxu0 0.0
    %297 = vmatpush1.msra.mxu0 %v197
    %298 = vmatprep.subr.mxu0 0.0
    %299 = vmatpush1.msra.mxu0 %v198
    %300 = vmatprep.subr.mxu0 0.0
    %301 = vmatpush1.msra.mxu0 %v199
    %302 = vmatprep.subr.mxu0 0.0
    %303 = vmatpush1.msra.mxu0 %v200
    %304 = vmatprep.subr.mxu0 0.0
    %305 = vmatpush1.msra.mxu0 %v201
    %306 = vmatprep.subr.mxu0 0.0
    %307 = vmatpush1.msra.mxu0 %v202
    %308 = vmatprep.subr.mxu0 0.0
    %309 = vmatpush1.msra.mxu0 0.0
    %310 = vmatprep.subr.mxu0 0.0
    %311 = vmatpush1.msra.mxu0 0.0
    %312 = vmatprep.subr.mxu0 0.0
    %313 = vmatpush1.msra.mxu0 0.0
    %314 = vmatprep.subr.mxu0 0.0
    %315 = vmatpush1.msra.mxu0 0.0
    %316 = vmatprep.subr.mxu0 0.0
    %317 = vmatpush1.msra.mxu0 0.0
    %318 = vmatprep.subr.mxu0 0.0
    %319 = vmatpush1.msra.mxu0 0.0
    %320 = vmatprep.subr.mxu0 0.0
    %321 = vmatpush1.msra.mxu0 0.0
    %322 = vmatprep.subr.mxu0 0.0
    %323 = vmatpush1.msra.mxu0 0.0
    %324 = vmatprep.subr.mxu0 0.0
    %325 = vmatpush1.msra.mxu0 0.0
    %326 = vmatprep.subr.mxu0 0.0
    %327 = vmatpush1.msra.mxu0 0.0
    %328 = vmatprep.subr.mxu0 0.0
    %329 = vmatpush1.msra.mxu0 0.0
    %330 = vmatprep.subr.mxu0 0.0
    %331 = vmatpush1.msra.mxu0 0.0
    %332 = vmatprep.subr.mxu0 0.0
    %333 = vmatpush1.msra.mxu0 0.0
    %334 = vmatprep.subr.mxu0 0.0
    %335 = vmatpush1.msra.mxu0 0.0
    %336 = vmatprep.subr.mxu0 0.0
    %337 = vmatpush1.msra.mxu0 0.0
    %338 = vmatprep.subr.mxu0 0.0
    %339 = vmatpush1.msra.mxu0 0.0
    %340 = vmatprep.mubr.f32.mxu0 0.0
    %341 = vmatmul.mubr.f32.gmra.mrb[0].mxu0 %v275
    %v342 = vpop.f32.mrb[0].mxu0
    %v343 = vadd.f32 0.0, %v342
    %v344 = vpop.f32.mrb[0].mxu0
    %345 = vdwg.mxu0
    %v346 = vadd.f32 %v159, %v343
    %v347 = vtanh.pop %v346
    %348 = vmatprep.subr.mxu0 0.0
    %349 = vmatpush1.msra.mxu0 %v187
    %350 = vmatprep.subr.mxu0 0.0
    %351 = vmatpush1.msra.mxu0 %v188
    %352 = vmatprep.subr.mxu0 0.0
    %353 = vmatpush1.msra.mxu0 %v189
    %354 = vmatprep.subr.mxu0 0.0
    %355 = vmatpush1.msra.mxu0 %v190
    %356 = vmatprep.subr.mxu0 0.0
    %357 = vmatpush1.msra.mxu0 %v191
    %358 = vmatprep.subr.mxu0 0.0
    %359 = vmatpush1.msra.mxu0 %v192
    %360 = vmatprep.subr.mxu0 0.0
    %361 = vmatpush1.msra.mxu0 %v193
    %362 = vmatprep.subr.mxu0 0.0
    %363 = vmatpush1.msra.mxu0 %v194
    %364 = vmatprep.subr.mxu0 0.0
    %365 = vmatpush1.msra.mxu0 %v195
    %366 = vmatprep.subr.mxu0 0.0
    %367 = vmatpush1.msra.mxu0 %v196
    %368 = vmatprep.subr.mxu0 0.0
    %369 = vmatpush1.msra.mxu0 %v197
    %370 = vmatprep.subr.mxu0 0.0
    %371 = vmatpush1.msra.mxu0 %v198
    %372 = vmatprep.subr.mxu0 0.0
    %373 = vmatpush1.msra.mxu0 %v199
    %374 = vmatprep.subr.mxu0 0.0
    %375 = vmatpush1.msra.mxu0 %v200
    %376 = vmatprep.subr.mxu0 0.0
    %377 = vmatpush1.msra.mxu0 %v201
    %378 = vmatprep.subr.mxu0 0.0
    %379 = vmatpush1.msra.mxu0 %v202
    %380 = vmatprep.subr.mxu0 0.0
    %381 = vmatpush1.msra.mxu0 0.0
    %382 = vmatprep.subr.mxu0 0.0
    %383 = vmatpush1.msra.mxu0 0.0
    %384 = vmatprep.subr.mxu0 0.0
    %385 = vmatpush1.msra.mxu0 0.0
    %386 = vmatprep.subr.mxu0 0.0
    %387 = vmatpush1.msra.mxu0 0.0
    %388 = vmatprep.subr.mxu0 0.0
    %389 = vmatpush1.msra.mxu0 0.0
    %390 = vmatprep.subr.mxu0 0.0
    %391 = vmatpush1.msra.mxu0 0.0
    %392 = vmatprep.subr.mxu0 0.0
    %393 = vmatpush1.msra.mxu0 0.0
    %394 = vmatprep.subr.mxu0 0.0
    %395 = vmatpush1.msra.mxu0 0.0
    %396 = vmatprep.subr.mxu0 0.0
    %397 = vmatpush1.msra.mxu0 0.0
    %398 = vmatprep.subr.mxu0 0.0
    %399 = vmatpush1.msra.mxu0 0.0
    %400 = vmatprep.subr.mxu0 0.0
    %401 = vmatpush1.msra.mxu0 0.0
    %402 = vmatprep.subr.mxu0 0.0
    %403 = vmatpush1.msra.mxu0 0.0
    %404 = vmatprep.subr.mxu0 0.0
    %405 = vmatpush1.msra.mxu0 0.0
    %406 = vmatprep.subr.mxu0 0.0
    %407 = vmatpush1.msra.mxu0 0.0
    %408 = vmatprep.subr.mxu0 0.0
    %409 = vmatpush1.msra.mxu0 0.0
    %410 = vmatprep.subr.mxu0 0.0
    %411 = vmatpush1.msra.mxu0 0.0
    %412 = vmatprep.mubr.f32.mxu0 0.0
    %413 = vmatmul.mubr.f32.gmra.mrb[0].mxu0 %v347
    %v414 = vpop.f32.mrb[0].mxu0
    %v415 = vadd.f32 0.0, %v414
    %v416 = vpop.f32.mrb[0].mxu0
    %417 = vdwg.mxu0
    %v418 = vadd.f32 %v164, %v415
    %v419 = vtanh.pop %v418
    %420 = vmatprep.subr.mxu0 0.0
    %421 = vmatpush1.msra.mxu0 %v187
    %422 = vmatprep.subr.mxu0 0.0
    %423 = vmatpush1.msra.mxu0 %v188
    %424 = vmatprep.subr.mxu0 0.0
    %425 = vmatpush1.msra.mxu0 %v189
    %426 = vmatprep.subr.mxu0 0.0
    %427 = vmatpush1.msra.mxu0 %v190
    %428 = vmatprep.subr.mxu0 0.0
    %429 = vmatpush1.msra.mxu0 %v191
    %430 = vmatprep.subr.mxu0 0.0
    %431 = vmatpush1.msra.mxu0 %v192
    %432 = vmatprep.subr.mxu0 0.0
    %433 = vmatpush1.msra.mxu0 %v193
    %434 = vmatprep.subr.mxu0 0.0
    %435 = vmatpush1.msra.mxu0 %v194
    %436 = vmatprep.subr.mxu0 0.0
    %437 = vmatpush1.msra.mxu0 %v195
    %438 = vmatprep.subr.mxu0 0.0
    %439 = vmatpush1.msra.mxu0 %v196
    %440 = vmatprep.subr.mxu0 0.0
    %441 = vmatpush1.msra.mxu0 %v197
    %442 = vmatprep.subr.mxu0 0.0
    %443 = vmatpush1.msra.mxu0 %v198
    %444 = vmatprep.subr.mxu0 0.0
    %445 = vmatpush1.msra.mxu0 %v199
    %446 = vmatprep.subr.mxu0 0.0
    %447 = vmatpush1.msra.mxu0 %v200
    %448 = vmatprep.subr.mxu0 0.0
    %449 = vmatpush1.msra.mxu0 %v201
    %450 = vmatprep.subr.mxu0 0.0
    %451 = vmatpush1.msra.mxu0 %v202
    %452 = vmatprep.subr.mxu0 0.0
    %453 = vmatpush1.msra.mxu0 0.0
    %454 = vmatprep.subr.mxu0 0.0
    %455 = vmatpush1.msra.mxu0 0.0
    %456 = vmatprep.subr.mxu0 0.0
    %457 = vmatpush1.msra.mxu0 0.0
    %458 = vmatprep.subr.mxu0 0.0
    %459 = vmatpush1.msra.mxu0 0.0
    %460 = vmatprep.subr.mxu0 0.0
    %461 = vmatpush1.msra.mxu0 0.0
    %462 = vmatprep.subr.mxu0 0.0
    %463 = vmatpush1.msra.mxu0 0.0
    %464 = vmatprep.subr.mxu0 0.0
    %465 = vmatpush1.msra.mxu0 0.0
    %466 = vmatprep.subr.mxu0 0.0
    %467 = vmatpush1.msra.mxu0 0.0
    %468 = vmatprep.subr.mxu0 0.0
    %469 = vmatpush1.msra.mxu0 0.0
    %470 = vmatprep.subr.mxu0 0.0
    %471 = vmatpush1.msra.mxu0 0.0
    %472 = vmatprep.subr.mxu0 0.0
    %473 = vmatpush1.msra.mxu0 0.0
    %474 = vmatprep.subr.mxu0 0.0
    %475 = vmatpush1.msra.mxu0 0.0
    %476 = vmatprep.subr.mxu0 0.0
    %477 = vmatpush1.msra.mxu0 0.0
    %478 = vmatprep.subr.mxu0 0.0
    %479 = vmatpush1.msra.mxu0 0.0
    %480 = vmatprep.subr.mxu0 0.0
    %481 = vmatpush1.msra.mxu0 0.0
    %482 = vmatprep.subr.mxu0 0.0
    %483 = vmatpush1.msra.mxu0 0.0
    %484 = vmatprep.mubr.f32.mxu0 0.0
    %485 = vmatmul.mubr.f32.gmra.mrb[0].mxu0 %v419
    %v486 = vpop.f32.mrb[0].mxu0
    %v487 = vadd.f32 0.0, %v486
    %v488 = vpop.f32.mrb[0].mxu0
    %489 = vdwg.mxu0
    %v490 = vadd.f32 %v169, %v487
    %v491 = vtanh.pop %v490
    %492 = vmatprep.subr.mxu0 0.0
    %493 = vmatpush1.msra.mxu0 %v187
    %494 = vmatprep.subr.mxu0 0.0
    %495 = vmatpush1.msra.mxu0 %v188
    %496 = vmatprep.subr.mxu0 0.0
    %497 = vmatpush1.msra.mxu0 %v189
    %498 = vmatprep.subr.mxu0 0.0
    %499 = vmatpush1.msra.mxu0 %v190
    %500 = vmatprep.subr.mxu0 0.0
    %501 = vmatpush1.msra.mxu0 %v191
    %502 = vmatprep.subr.mxu0 0.0
    %503 = vmatpush1.msra.mxu0 %v192
    %504 = vmatprep.subr.mxu0 0.0
    %505 = vmatpush1.msra.mxu0 %v193
    %506 = vmatprep.subr.mxu0 0.0
    %507 = vmatpush1.msra.mxu0 %v194
    %508 = vmatprep.subr.mxu0 0.0
    %509 = vmatpush1.msra.mxu0 %v195
    %510 = vmatprep.subr.mxu0 0.0
    %511 = vmatpush1.msra.mxu0 %v196
    %512 = vmatprep.subr.mxu0 0.0
    %513 = vmatpush1.msra.mxu0 %v197
    %514 = vmatprep.subr.mxu0 0.0
    %515 = vmatpush1.msra.mxu0 %v198
    %516 = vmatprep.subr.mxu0 0.0
    %517 = vmatpush1.msra.mxu0 %v199
    %518 = vmatprep.subr.mxu0 0.0
    %519 = vmatpush1.msra.mxu0 %v200
    %520 = vmatprep.subr.mxu0 0.0
    %521 = vmatpush1.msra.mxu0 %v201
    %522 = vmatprep.subr.mxu0 0.0
    %523 = vmatpush1.msra.mxu0 %v202
    %524 = vmatprep.subr.mxu0 0.0
    %525 = vmatpush1.msra.mxu0 0.0
    %526 = vmatprep.subr.mxu0 0.0
    %527 = vmatpush1.msra.mxu0 0.0
    %528 = vmatprep.subr.mxu0 0.0
    %529 = vmatpush1.msra.mxu0 0.0
    %530 = vmatprep.subr.mxu0 0.0
    %531 = vmatpush1.msra.mxu0 0.0
    %532 = vmatprep.subr.mxu0 0.0
    %533 = vmatpush1.msra.mxu0 0.0
    %534 = vmatprep.subr.mxu0 0.0
    %535 = vmatpush1.msra.mxu0 0.0
    %536 = vmatprep.subr.mxu0 0.0
    %537 = vmatpush1.msra.mxu0 0.0
    %538 = vmatprep.subr.mxu0 0.0
    %539 = vmatpush1.msra.mxu0 0.0
    %540 = vmatprep.subr.mxu0 0.0
    %541 = vmatpush1.msra.mxu0 0.0
    %542 = vmatprep.subr.mxu0 0.0
    %543 = vmatpush1.msra.mxu0 0.0
    %544 = vmatprep.subr.mxu0 0.0
    %545 = vmatpush1.msra.mxu0 0.0
    %546 = vmatprep.subr.mxu0 0.0
    %547 = vmatpush1.msra.mxu0 0.0
    %548 = vmatprep.subr.mxu0 0.0
    %549 = vmatpush1.msra.mxu0 0.0
    %550 = vmatprep.subr.mxu0 0.0
    %551 = vmatpush1.msra.mxu0 0.0
    %552 = vmatprep.subr.mxu0 0.0
    %553 = vmatpush1.msra.mxu0 0.0
    %554 = vmatprep.subr.mxu0 0.0
    %555 = vmatpush1.msra.mxu0 0.0
    %556 = vmatprep.mubr.f32.mxu0 0.0
    %557 = vmatmul.mubr.f32.gmra.mrb[0].mxu0 %v491
    %v558 = vpop.f32.mrb[0].mxu0
    %v559 = vadd.f32 0.0, %v558
    %v560 = vpop.f32.mrb[0].mxu0
    %561 = vdwg.mxu0
    %v562 = vadd.f32 %v174, %v559
    %v563 = vtanh.pop %v562
    %564 = vmatprep.subr.mxu0 0.0
    %565 = vmatpush1.msra.mxu0 %v187
    %566 = vmatprep.subr.mxu0 0.0
    %567 = vmatpush1.msra.mxu0 %v188
    %568 = vmatprep.subr.mxu0 0.0
    %569 = vmatpush1.msra.mxu0 %v189
    %570 = vmatprep.subr.mxu0 0.0
    %571 = vmatpush1.msra.mxu0 %v190
    %572 = vmatprep.subr.mxu0 0.0
    %573 = vmatpush1.msra.mxu0 %v191
    %574 = vmatprep.subr.mxu0 0.0
    %575 = vmatpush1.msra.mxu0 %v192
    %576 = vmatprep.subr.mxu0 0.0
    %577 = vmatpush1.msra.mxu0 %v193
    %578 = vmatprep.subr.mxu0 0.0
    %579 = vmatpush1.msra.mxu0 %v194
    %580 = vmatprep.subr.mxu0 0.0
    %581 = vmatpush1.msra.mxu0 %v195
    %582 = vmatprep.subr.mxu0 0.0
    %583 = vmatpush1.msra.mxu0 %v196
    %584 = vmatprep.subr.mxu0 0.0
    %585 = vmatpush1.msra.mxu0 %v197
    %586 = vmatprep.subr.mxu0 0.0
    %587 = vmatpush1.msra.mxu0 %v198
    %588 = vmatprep.subr.mxu0 0.0
    %589 = vmatpush1.msra.mxu0 %v199
    %590 = vmatprep.subr.mxu0 0.0
    %591 = vmatpush1.msra.mxu0 %v200
    %592 = vmatprep.subr.mxu0 0.0
    %593 = vmatpush1.msra.mxu0 %v201
    %594 = vmatprep.subr.mxu0 0.0
    %595 = vmatpush1.msra.mxu0 %v202
    %596 = vmatprep.subr.mxu0 0.0
    %597 = vmatpush1.msra.mxu0 0.0
    %598 = vmatprep.subr.mxu0 0.0
    %599 = vmatpush1.msra.mxu0 0.0
    %600 = vmatprep.subr.mxu0 0.0
    %601 = vmatpush1.msra.mxu0 0.0
    %602 = vmatprep.subr.mxu0 0.0
    %603 = vmatpush1.msra.mxu0 0.0
    %604 = vmatprep.subr.mxu0 0.0
    %605 = vmatpush1.msra.mxu0 0.0
    %606 = vmatprep.subr.mxu0 0.0
    %607 = vmatpush1.msra.mxu0 0.0
    %608 = vmatprep.subr.mxu0 0.0
    %609 = vmatpush1.msra.mxu0 0.0
    %610 = vmatprep.subr.mxu0 0.0
    %611 = vmatpush1.msra.mxu0 0.0
    %612 = vmatprep.subr.mxu0 0.0
    %613 = vmatpush1.msra.mxu0 0.0
    %614 = vmatprep.subr.mxu0 0.0
    %615 = vmatpush1.msra.mxu0 0.0
    %616 = vmatprep.subr.mxu0 0.0
    %617 = vmatpush1.msra.mxu0 0.0
    %618 = vmatprep.subr.mxu0 0.0
    %619 = vmatpush1.msra.mxu0 0.0
    %620 = vmatprep.subr.mxu0 0.0
    %621 = vmatpush1.msra.mxu0 0.0
    %622 = vmatprep.subr.mxu0 0.0
    %623 = vmatpush1.msra.mxu0 0.0
    %624 = vmatprep.subr.mxu0 0.0
    %625 = vmatpush1.msra.mxu0 0.0
    %626 = vmatprep.subr.mxu0 0.0
    %627 = vmatpush1.msra.mxu0 0.0
    %628 = vmatprep.mubr.f32.mxu0 0.0
    %629 = vmatmul.mubr.f32.gmra.mrb[0].mxu0 %v563
    %v630 = vpop.f32.mrb[0].mxu0
    %v631 = vadd.f32 0.0, %v630
    %v632 = vpop.f32.mrb[0].mxu0
    %633 = vdwg.mxu0
    %v634 = vadd.f32 %v179, %v631
    %v635 = vtanh.pop %v634
    %636 = vmatprep.subr.mxu0 0.0
    %637 = vmatpush1.msra.mxu0 %v187
    %638 = vmatprep.subr.mxu0 0.0
    %639 = vmatpush1.msra.mxu0 %v188
    %640 = vmatprep.subr.mxu0 0.0
    %641 = vmatpush1.msra.mxu0 %v189
    %642 = vmatprep.subr.mxu0 0.0
    %643 = vmatpush1.msra.mxu0 %v190
    %644 = vmatprep.subr.mxu0 0.0
    %645 = vmatpush1.msra.mxu0 %v191
    %646 = vmatprep.subr.mxu0 0.0
    %647 = vmatpush1.msra.mxu0 %v192
    %648 = vmatprep.subr.mxu0 0.0
    %649 = vmatpush1.msra.mxu0 %v193
    %650 = vmatprep.subr.mxu0 0.0
    %651 = vmatpush1.msra.mxu0 %v194
    %652 = vmatprep.subr.mxu0 0.0
    %653 = vmatpush1.msra.mxu0 %v195
    %654 = vmatprep.subr.mxu0 0.0
    %655 = vmatpush1.msra.mxu0 %v196
    %656 = vmatprep.subr.mxu0 0.0
    %657 = vmatpush1.msra.mxu0 %v197
    %658 = vmatprep.subr.mxu0 0.0
    %659 = vmatpush1.msra.mxu0 %v198
    %660 = vmatprep.subr.mxu0 0.0
    %661 = vmatpush1.msra.mxu0 %v199
    %662 = vmatprep.subr.mxu0 0.0
    %663 = vmatpush1.msra.mxu0 %v200
    %664 = vmatprep.subr.mxu0 0.0
    %665 = vmatpush1.msra.mxu0 %v201
    %666 = vmatprep.subr.mxu0 0.0
    %667 = vmatpush1.msra.mxu0 %v202
    %668 = vmatprep.subr.mxu0 0.0
    %669 = vmatpush1.msra.mxu0 0.0
    %670 = vmatprep.subr.mxu0 0.0
    %671 = vmatpush1.msra.mxu0 0.0
    %672 = vmatprep.subr.mxu0 0.0
    %673 = vmatpush1.msra.mxu0 0.0
    %674 = vmatprep.subr.mxu0 0.0
    %675 = vmatpush1.msra.mxu0 0.0
    %676 = vmatprep.subr.mxu0 0.0
    %677 = vmatpush1.msra.mxu0 0.0
    %678 = vmatprep.subr.mxu0 0.0
    %679 = vmatpush1.msra.mxu0 0.0
    %680 = vmatprep.subr.mxu0 0.0
    %681 = vmatpush1.msra.mxu0 0.0
    %682 = vmatprep.subr.mxu0 0.0
    %683 = vmatpush1.msra.mxu0 0.0
    %684 = vmatprep.subr.mxu0 0.0
    %685 = vmatpush1.msra.mxu0 0.0
    %686 = vmatprep.subr.mxu0 0.0
    %687 = vmatpush1.msra.mxu0 0.0
    %688 = vmatprep.subr.mxu0 0.0
    %689 = vmatpush1.msra.mxu0 0.0
    %690 = vmatprep.subr.mxu0 0.0
    %691 = vmatpush1.msra.mxu0 0.0
    %692 = vmatprep.subr.mxu0 0.0
    %693 = vmatpush1.msra.mxu0 0.0
    %694 = vmatprep.subr.mxu0 0.0
    %695 = vmatpush1.msra.mxu0 0.0
    %696 = vmatprep.subr.mxu0 0.0
    %697 = vmatpush1.msra.mxu0 0.0
    %698 = vmatprep.subr.mxu0 0.0
    %699 = vmatpush1.msra.mxu0 0.0
    %700 = vmatprep.mubr.f32.mxu0 0.0
    %701 = vmatmul.mubr.f32.gmra.mrb[0].mxu0 %v635
    %v702 = vpop.f32.mrb[0].mxu0
    %v703 = vadd.f32 0.0, %v702
    %v704 = vpop.f32.mrb[0].mxu0
    %705 = vdwg.mxu0
    %v706 = vadd.f32 %v184, %v703
    %v707 = vtanh.pop %v706
    %v708 = vld [vmem:[#allocation4] sm:$0xff]
    %v709 = vld [vmem:[#allocation4 + $0x8] sm:$0xff]
    %v710 = vld [vmem:[#allocation4 + $0x10] sm:$0xff]
    %v711 = vld [vmem:[#allocation4 + $0x18] sm:$0xff]
    %v712 = vld [vmem:[#allocation4 + $0x20] sm:$0xff]
    %v713 = vld [vmem:[#allocation4 + $0x28] sm:$0xff]
    %v714 = vld [vmem:[#allocation4 + $0x30] sm:$0xff]
    %v715 = vld [vmem:[#allocation4 + $0x38] sm:$0xff]
    %v716 = vld [vmem:[#allocation4 + $0x40] sm:$0xff]
    %v717 = vld [vmem:[#allocation4 + $0x48] sm:$0xff]
    %v718 = vld [vmem:[#allocation4 + $0x50] sm:$0xff]
    %v719 = vld [vmem:[#allocation4 + $0x58] sm:$0xff]
    %v720 = vld [vmem:[#allocation4 + $0x60] sm:$0xff]
    %v721 = vld [vmem:[#allocation4 + $0x68] sm:$0xff]
    %v722 = vld [vmem:[#allocation4 + $0x70] sm:$0xff]
    %v723 = vld [vmem:[#allocation4 + $0x78] sm:$0xff]
    %v724 = vld [vmem:[%s5] sm:$0x1]
    %v726 = vlaneseq
    %v727 = vshrl.u32 %v726, 7
    %v728 = vsub.s32 0, %v727
    %v729 = vrot.slane %v724, %v728
    %731 = vmatprep.subr.mxu0 0.0
    %732 = vmatpush1.msra.mxu0 %v708
    %733 = vmatprep.subr.mxu0 0.0
    %734 = vmatpush1.msra.mxu0 %v709
    %735 = vmatprep.subr.mxu0 0.0
    %736 = vmatpush1.msra.mxu0 %v710
    %737 = vmatprep.subr.mxu0 0.0
    %738 = vmatpush1.msra.mxu0 %v711
    %739 = vmatprep.subr.mxu0 0.0
    %740 = vmatpush1.msra.mxu0 %v712
    %741 = vmatprep.subr.mxu0 0.0
    %742 = vmatpush1.msra.mxu0 %v713
    %743 = vmatprep.subr.mxu0 0.0
    %744 = vmatpush1.msra.mxu0 %v714
    %745 = vmatprep.subr.mxu0 0.0
    %746 = vmatpush1.msra.mxu0 %v715
    %747 = vmatprep.subr.mxu0 0.0
    %748 = vmatpush1.msra.mxu0 %v716
    %749 = vmatprep.subr.mxu0 0.0
    %750 = vmatpush1.msra.mxu0 %v717
    %751 = vmatprep.subr.mxu0 0.0
    %752 = vmatpush1.msra.mxu0 %v718
    %753 = vmatprep.subr.mxu0 0.0
    %754 = vmatpush1.msra.mxu0 %v719
    %755 = vmatprep.subr.mxu0 0.0
    %756 = vmatpush1.msra.mxu0 %v720
    %757 = vmatprep.subr.mxu0 0.0
    %758 = vmatpush1.msra.mxu0 %v721
    %759 = vmatprep.subr.mxu0 0.0
    %760 = vmatpush1.msra.mxu0 %v722
    %761 = vmatprep.subr.mxu0 0.0
    %762 = vmatpush1.msra.mxu0 %v723
    %763 = vmatprep.subr.mxu0 0.0
    %764 = vmatpush1.msra.mxu0 0.0
    %765 = vmatprep.subr.mxu0 0.0
    %766 = vmatpush1.msra.mxu0 0.0
    %767 = vmatprep.subr.mxu0 0.0
    %768 = vmatpush1.msra.mxu0 0.0
    %769 = vmatprep.subr.mxu0 0.0
    %770 = vmatpush1.msra.mxu0 0.0
    %771 = vmatprep.subr.mxu0 0.0
    %772 = vmatpush1.msra.mxu0 0.0
    %773 = vmatprep.subr.mxu0 0.0
    %774 = vmatpush1.msra.mxu0 0.0
    %775 = vmatprep.subr.mxu0 0.0
    %776 = vmatpush1.msra.mxu0 0.0
    %777 = vmatprep.subr.mxu0 0.0
    %778 = vmatpush1.msra.mxu0 0.0
    %779 = vmatprep.subr.mxu0 0.0
    %780 = vmatpush1.msra.mxu0 0.0
    %781 = vmatprep.subr.mxu0 0.0
    %782 = vmatpush1.msra.mxu0 0.0
    %783 = vmatprep.subr.mxu0 0.0
    %784 = vmatpush1.msra.mxu0 0.0
    %785 = vmatprep.subr.mxu0 0.0
    %786 = vmatpush1.msra.mxu0 0.0
    %787 = vmatprep.subr.mxu0 0.0
    %788 = vmatpush1.msra.mxu0 0.0
    %789 = vmatprep.subr.mxu0 0.0
    %790 = vmatpush1.msra.mxu0 0.0
    %791 = vmatprep.subr.mxu0 0.0
    %792 = vmatpush1.msra.mxu0 0.0
    %793 = vmatprep.subr.mxu0 0.0
    %794 = vmatpush1.msra.mxu0 0.0
    %795 = vmatprep.mubr.f32.mxu0 0.0
    %796 = vmatmul.mubr.f32.gmra.mrb[0].mxu0 %v707
    %v797 = vpop.f32.mrb[0].mxu0
    %v798 = vadd.f32 %v729, %v797
    %v799 = vpop.f32.mrb[0].mxu0
    %800 = vdwg.mxu0
    %801 = vmax.xlane.f32.xlu0 %v798
    %v802 = vpop.xlane.xlu0 %801
    %v803 = vsub.f32 %v798, %v802
    %v804 = vmul.f32 %v803, 1.442695
    %v805 = vpow.pop %v804
    %806 = vadd.xlane.f32.xlu0 %v805
    %v807 = vpop.xlane.xlu0 %806
    %v808 = vlog2.pop %v807
    %v809 = vmul.f32 %v808, 0.6931472
    %v810 = vsub.f32 %v803, %v809
    %811 = vst [vmem:[%s6] sm:$0xff] %v810
    // Predicated region
    $region34: #{rnn_forward.1} parent=1 // pred_check
      _
    $region35: #{rnn_forward.1} parent=1 // pred_check_branch
      %813 = sbr.rel (0) target = $region37
    $region36: #{rnn_forward.1} parent=1 // pred_region
      _
    $region37: #{rnn_forward.1} parent=1 // pred_fallthru
      _
    // Predicated region
    $region38: #{rnn_forward.1} parent=1 // pred_check
      _
    $region39: #{rnn_forward.1} parent=1 // pred_check_branch
      %815 = sbr.rel (0) target = $region41
    $region40: #{rnn_forward.1} parent=1 // pred_region
      _
    $region41: #{rnn_forward.1} parent=1 // pred_fallthru
      _
    %816 = vsyncpa [#allocation3], 1
    %817 = vsyncpa [#allocation5], 1

</llo_original>
